<compile_context>
chip_gen: v7x
topology: tpu7x:2x2x1
jax: 0.10.0
libtpu: 0.0.40
codegen_flags: <defaults>
</compile_context>

<pallas_src>
import math

import numpy as np
import jax
import jax.numpy as jnp
from jax.experimental import pallas as pl
from jax.experimental.pallas import tpu as pltpu


def _copy_kernel(x_ref, o_ref):
    # One tile: lane-dense identity copy (straight vld/vst).
    o_ref[...] = x_ref[...]


def _sublane_multiple(dtype) -> int:
    # Packed-tile minimum second-minor multiple: f32 -> 8, bf16 -> 16, int8/fp8 -> 32.
    return {4: 8, 2: 16, 1: 32}.get(jnp.dtype(dtype).itemsize, 8)


# ~2 MiB per buffer; with one input + one output, each double-buffered,
# the per-step VMEM footprint is ~8 MiB — safe on v5e / v6e / v7x defaults.
_TARGET_BLOCK_BYTES = 2 << 20


def _choose_slab(n: int, flat: int) -> tuple[int, int]:
    """Pick a 2-D, row-major-equivalent view of the buffer to copy."""
    total = n * flat
    if flat % 128 == 0:
        return (n, flat)            # natural rows are already lane-aligned
    if total % 128 == 0:
        return (total // 128, 128)  # lane-dense repack: unmasked stores, contiguous tiles
    return (n, flat)                # fallback: masked edge lanes (still correct)


def _pick_block(rows: int, cols: int, itemsize: int, sub_mult: int) -> tuple[int, int]:
    """Byte-budgeted block: lane axis grown first (full extent if possible)."""
    max_bc = max(128, (_TARGET_BLOCK_BYTES // (sub_mult * itemsize)) // 128 * 128)
    bc = cols if cols <= max_bc else max_bc                      # full dim or x128
    max_br = max(sub_mult,
                 (_TARGET_BLOCK_BYTES // (bc * itemsize)) // sub_mult * sub_mult)
    br = rows if rows <= max_br else max_br                      # full dim or x sub_mult
    return br, bc


def flatten_pallas(x: jax.Array) -> jax.Array:
    """Pallas equivalent of torch.flatten(x, 1)."""
    n = x.shape[0]
    flat = int(math.prod(x.shape[1:])) if x.ndim > 1 else 1
    itemsize = jnp.dtype(x.dtype).itemsize
    total = n * flat

    rows, cols = _choose_slab(n, flat)
    x2 = jnp.reshape(x, (rows, cols))   # metadata-only (row-major contiguous)

    sub = _sublane_multiple(x.dtype)
    br, bc = _pick_block(rows, cols, itemsize, sub)
    grid = (pl.cdiv(rows, br), pl.cdiv(cols, bc))

    y = pl.pallas_call(
        _copy_kernel,
        out_shape=jax.ShapeDtypeStruct((rows, cols), x.dtype),
        grid=grid,
        in_specs=[pl.BlockSpec((br, bc), lambda i, j: (i, j))],
        out_specs=pl.BlockSpec((br, bc), lambda i, j: (i, j)),
        compiler_params=pltpu.CompilerParams(
            dimension_semantics=("parallel", "parallel")),
        cost_estimate=pl.CostEstimate(
            flops=0, transcendentals=0, bytes_accessed=2 * total * itemsize),
    )(x2)

    # Free metadata reshape back to the Flatten output shape.
    return jnp.reshape(y, (n, flat))


if __name__ == "__main__":
    key = jax.random.PRNGKey(0)

    # Primary case: small NCHW classifier feature map, f32.
    x = jax.random.normal(key, (2, 4, 16, 16), dtype=jnp.float32)
    y_ref = jnp.reshape(x, (x.shape[0], -1))          # == torch.flatten(x, 1)
    y = flatten_pallas(x)
    jax.block_until_ready(y)
    assert y.shape == (2, 4 * 16 * 16), y.shape
    assert y.dtype == x.dtype
    np.testing.assert_array_equal(np.asarray(y), np.asarray(y_ref))

    # bf16: exercises the dtype-aware (16, 128) sublane-multiple path.
    xb = x.astype(jnp.bfloat16)
    yb = flatten_pallas(xb)
    jax.block_until_ready(yb)
    np.testing.assert_array_equal(
        np.asarray(yb), np.asarray(jnp.reshape(xb, (2, -1))))

    # flat (24) not a multiple of 128, but total (384) is -> lane-dense repack path.
    xr = jax.random.normal(key, (16, 2, 3, 4), dtype=jnp.float32)
    yr = flatten_pallas(xr)
    jax.block_until_ready(yr)
    np.testing.assert_array_equal(
        np.asarray(yr), np.asarray(jnp.reshape(xr, (16, -1))))

    # Neither flat (75) nor total (150) 128-aligned -> masked fallback path.
    xm = jax.random.normal(key, (2, 3, 5, 5), dtype=jnp.float32)
    ym = flatten_pallas(xm)
    jax.block_until_ready(ym)
    np.testing.assert_array_equal(
        np.asarray(ym), np.asarray(jnp.reshape(xm, (2, -1))))

    print("KERNEL_OK")
</pallas_src>

<mosaic_0001>
module attributes {stable_mosaic.version = 11 : i64} {
  func.func @_copy_kernel(%arg0: i32, %arg1: i32, %arg2: memref<2x1024xf32, #tpu.memory_space<vmem>>, %arg3: memref<2x1024xf32, #tpu.memory_space<vmem>>) attributes {dimension_semantics = [#tpu.dimension_semantics<parallel>, #tpu.dimension_semantics<parallel>], iteration_bounds = array<i64: 1, 1>, scalar_prefetch = 0 : i64, scratch_operands = 0 : i64, tpu.core_type = #tpu.core_type<tc>, window_params = [{transform_indices = @transform_0, window_bounds = array<i64: 2, 1024>}, {transform_indices = @transform_1, window_bounds = array<i64: 2, 1024>}]} {
    %c0 = arith.constant 0 : index
    %c0_0 = arith.constant 0 : index
    %0 = vector.load %arg2[%c0, %c0_0] : memref<2x1024xf32, #tpu.memory_space<vmem>>, vector<2x1024xf32>
    %c0_1 = arith.constant 0 : index
    %c0_2 = arith.constant 0 : index
    %1 = vector.load %arg3[%c0_1, %c0_2] : memref<2x1024xf32, #tpu.memory_space<vmem>>, vector<2x1024xf32>
    tpu.vector_store %arg3[%c0_1, %c0_2], %0 {strides = array<i32>} : memref<2x1024xf32, #tpu.memory_space<vmem>>, vector<2x1024xf32>,
    return
  }
  func.func @transform_0(%arg0: i32, %arg1: i32) -> (i32, i32) {
    %c0_i32 = arith.constant 0 : i32
    return %arg0, %arg1 : i32, i32
  }
  func.func @transform_1(%arg0: i32, %arg1: i32) -> (i32, i32) {
    %c0_i32 = arith.constant 0 : i32
    return %arg0, %arg1 : i32, i32
  }
}

</mosaic_0001>

<llo_original>
// kernel: tpu_custom_call.1
$region0: #{tpu_custom_call.1}
  #allocation0 [shape = 'u32[]', space=smem, size = 0x4, offset = 0x4, fixed_abs, tag = 'smem constant byte address 0x4 - core index']
  #allocation1 [shape = 'u32[144,128]{1,0:T(1,128)}', space=vmem, size = 0x12000, scoped, tag = 'internal scratch']
  %s0 = inlined_call_operand.hbm [shape: f32[2,1024], index: 0, kind: input, shape index: {}]
  %s1 = inlined_call_operand.hbm [shape: f32[2,1024], index: 1, kind: output, shape index: {}]
  %s2 = sld [smem:[#allocation0]]
  $region18: #{tpu_custom_call.1} parent=0
    _
  %s4 = ssub.s32 1, %s2
  %s5 = scalar_select 0, %s4, %s2
  $region1: #{tpu_custom_call.1} parent=0
    #allocation2 [shape = 'u8[8192]{0}', space=vmem, size = 0x2000, scoped, tag = 'input window, operand 0, single buffered']
    #allocation3 [shape = 's32[1]{0}', space=sflag, size = 0x4, scoped, tag = 'scoped memory for tpu_custom_call.1']
    #allocation4 [shape = 's32[1]{0}', space=sflag, size = 0x4, scoped, tag = 'scoped memory for tpu_custom_call.1']
    #allocation5 [shape = 'u8[8192]{0}', space=vmem, size = 0x2000, scoped, tag = 'output window, operand 0, single buffered']
    %6 = vsyncpa [#allocation3], 0
    %7 = vsyncpa [#allocation4], 0
    // Predicated region
    $region2: #{tpu_custom_call.1} parent=1 // pred_check
      _
    $region3: #{tpu_custom_call.1} parent=1 // pred_check_branch
      %9 = sbr.rel (0) target = $region5
    $region4: #{tpu_custom_call.1} parent=1 // pred_region
      %s11 = ssub.s32 256, 256
      %12 = vsyncadd [#allocation3], %s11
      %s14 = sshll.u32 [#allocation2], 4
      %s15 = int_to_ptr.vmem [resolvable:$true] %s14
      %17 = dma.hbm_to_vmem [thread:$0]  %s0, 256, %s15, [#allocation3]
    $region5: #{tpu_custom_call.1} parent=1 // pred_fallthru
      _
    // Predicated region
    $region6: #{tpu_custom_call.1} parent=1 // pred_check
      _
    $region7: #{tpu_custom_call.1} parent=1 // pred_check_branch
      %19 = sbr.rel (0) target = $region9
    $region8: #{tpu_custom_call.1} parent=1 // pred_region
      %20 = dma.done [#allocation3], 256
    $region9: #{tpu_custom_call.1} parent=1 // pred_fallthru
      _
    %v21 = vld [vmem:[#allocation2] sm:$0xff]
    %v22 = vld [vmem:[#allocation2 + $0x8] sm:$0xff]
    %23 = vst [vmem:[#allocation5] sm:$0xff] %v21
    %24 = vst [vmem:[#allocation5 + $0x8] sm:$0xff] %v22
    // Predicated region
    $region10: #{tpu_custom_call.1} parent=1 // pred_check
      _
    $region11: #{tpu_custom_call.1} parent=1 // pred_check_branch
      %26 = sbr.rel (0) target = $region13
    $region12: #{tpu_custom_call.1} parent=1 // pred_region
      %s28 = ssub.s32 256, 256
      %29 = vsyncadd [#allocation4], %s28
      %s31 = sshll.u32 [#allocation5], 4
      %s32 = int_to_ptr.vmem [resolvable:$true] %s31
      %34 = dma.vmem_to_hbm [thread:$0]  %s32, 256, %s1, [#allocation4]
    $region13: #{tpu_custom_call.1} parent=1 // pred_fallthru
      _
    // Predicated region
    $region14: #{tpu_custom_call.1} parent=1 // pred_check
      _
    $region15: #{tpu_custom_call.1} parent=1 // pred_check_branch
      %36 = sbr.rel (0) target = $region17
    $region16: #{tpu_custom_call.1} parent=1 // pred_region
      %37 = dma.done [#allocation4], 256
    $region17: #{tpu_custom_call.1} parent=1 // pred_fallthru
      _
    %38 = vsyncpa [#allocation3], 1
    %39 = vsyncpa [#allocation4], 1

</llo_original>
